<compile_context>
chip_gen: v5e
topology: v5e:2x2
jax: 0.10.0
libtpu: 0.0.40
codegen_flags: <defaults>
</compile_context>

<pallas_src>
import jax
import jax.numpy as jnp
from jax.experimental import pallas as pl
from jax.experimental.pallas import tpu as pltpu

# ----------------------------- config (mirrors args) -----------------------
B = 2               # batch size
N = 8               # args.num_nodes
F = 2               # args.num_features == in_feature
L = 8               # args.seq_len
LP = 8              # prediction horizon (targets_time length)
D = 32              # args.d_model
TF = 5              # args.time_features
PPH = 12            # args.points_per_hour
M = 3               # args.M
H = 4 * D           # hidden_dim = d_model * 4
NUM_LAYER = 3
TOD_SIZE = PPH * 24
DOW_SIZE = 7
EPS = 1e-5

CIN = F * L + 3 * D         # raw encoder input width (ts || node || tid || diw)
CIN_PAD = 128               # lane-aligned (zero-padded) input width
OUT = L * F                 # regression output channels (= 16)
OUT_PAD = 128               # lane-aligned output width (unmasked stores)
T_TOK = B * N               # 16 tokens -> single grid step


# ----------------------------- Pallas kernel --------------------------------
def _encoder_kernel(x_ref, win_ref, bin_ref, w1_ref, b1_ref, w2_ref, b2_ref,
                    wreg_ref, breg_ref, out_ref):
    """Fused Input_module encoder:
       h = [ts_emb | node_emb | tid_emb | diw_emb]  (via one block matmul)
       3x residual MLP: h = h + fc2(relu(fc1(h)))   (dropout = identity, eval)
       out = regression 1x1 conv (h @ W_reg + b_reg), lane-padded to 128.
    MXU dots use bf16 operands with f32 accumulation; VPU math stays f32."""
    # time-series 1x1 conv + embedding pass-through in one f32 matmul
    # (W_in = [[W_ts, 0], [0, I_3D]] so embeddings pass through exactly).
    h = jnp.dot(x_ref[...], win_ref[...],
                preferred_element_type=jnp.float32) + bin_ref[...]
    for i in range(NUM_LAYER):
        z = jnp.dot(h.astype(jnp.bfloat16), w1_ref[i],
                    preferred_element_type=jnp.float32) + b1_ref[i]
        z = jnp.maximum(z, 0.0)
        z = jnp.dot(z.astype(jnp.bfloat16), w2_ref[i],
                    preferred_element_type=jnp.float32) + b2_ref[i]
        h = h + z
    # lane-dense (128-wide) output -> unmasked vst; wrapper slices [:, :OUT]
    out_ref[...] = jnp.dot(h.astype(jnp.bfloat16), wreg_ref[...],
                           preferred_element_type=jnp.float32) + breg_ref[...]


def run_encoder(x_all, p):
    T = x_all.shape[0]

    def full(shape):
        return pl.BlockSpec(shape, lambda i: (0,) * len(shape))

    # Single grid step: every block is the full array, so no per-step pipeline
    # overhead and no weight double-buffering churn.
    return pl.pallas_call(
        _encoder_kernel,
        out_shape=jax.ShapeDtypeStruct((T, OUT_PAD), jnp.float32),
        grid=(1,),
        in_specs=[
            full((T, CIN_PAD)),
            full((CIN_PAD, H)), full((1, H)),
            full((NUM_LAYER, H, H)), full((NUM_LAYER, 1, H)),
            full((NUM_LAYER, H, H)), full((NUM_LAYER, 1, H)),
            full((H, OUT_PAD)), full((1, OUT_PAD)),
        ],
        out_specs=full((T, OUT_PAD)),
        compiler_params=pltpu.CompilerParams(
            dimension_semantics=("arbitrary",)),
    )(x_all, p['W_in'], p['b_in'], p['W1'], p['b1'], p['W2'], p['b2'],
      p['W_reg'], p['b_reg'])


# ----------------------------- JAX glue -------------------------------------
def bn_eval(x, gamma, beta):
    # BatchNorm2d, eval mode, running_mean=0 / running_var=1
    return x * (gamma / jnp.sqrt(1.0 + EPS))[None, :, None, None] \
           + beta[None, :, None, None]


def compute_adj_adp(p):
    # Tiny (8x8) -> plain jnp; a dedicated pallas_call would cost more than the math.
    e1 = p['memory_bank'] @ p['We1']
    e2 = p['memory_bank'] @ p['We2']
    adj = e1 @ e2.T
    mean = jnp.mean(adj, axis=-1, keepdims=True)
    # torch.std default is unbiased (ddof=1); eps guards var==0 rows
    var = jnp.sum((adj - mean) ** 2, axis=-1, keepdims=True) / (adj.shape[-1] - 1)
    adj = (adj - mean) / jnp.sqrt(var + 1e-12)
    eye = jnp.eye(N, dtype=jnp.float32)
    logits = jnp.maximum(adj, 0.0) - eye * 1e6
    return jax.nn.softmax(logits, axis=-1)


def input_module(input_data, seq_time, p):
    hour = (seq_time[:, -2:-1] + 0.5) * 23.0
    minute = (seq_time[:, -1:] + 0.5) * 59.0
    hour_index = (hour * 60.0 + minute) / (60.0 / PPH)           # (B,1,1,L)
    tid_idx = jnp.floor(jnp.tile(hour_index[..., -1][:, 0, :], (1, N))
                        ).astype(jnp.int32)                      # trunc == .long()
    tid_e = p['time_in_day_emb'][tid_idx]                        # (B,N,D)
    day = (seq_time[:, 2:3] + 0.5) * 6.0
    diw_idx = jnp.floor(jnp.tile(day[..., -1][:, 0, :], (1, N))
                        ).astype(jnp.int32)
    diw_e = p['day_in_week_emb'][diw_idx]                        # (B,N,D)

    # tokens-on-sublane, channels-on-lane: (B,F,N,L) -> (B*N, F*L)
    ts_in = jnp.transpose(input_data, (0, 2, 1, 3)).reshape(B * N, F * L)
    node_e = jnp.tile(p['memory_bank'], (B, 1))                  # (B*N, D)

    # single pre-concatenated (and zero-padded to 128 lanes) encoder input
    x_all = jnp.concatenate([ts_in, node_e,
                             tid_e.reshape(B * N, D),
                             diw_e.reshape(B * N, D)], axis=-1)  # (B*N, CIN)
    x_all = jnp.pad(x_all, ((0, 0), (0, CIN_PAD - CIN)))

    out_tok = run_encoder(x_all, p)[:, :OUT]                     # (B*N, L*F)
    # regression output: channel index = f*L + l  ->  (B,F,N,L)
    hidden = out_tok.reshape(B, N, F, L).transpose(0, 2, 1, 3)
    return bn_eval(hidden, p['bn_hidden_g'], p['bn_hidden_b'])


def date2vec(x_ext, d2v_in, p):
    # TODO(synk): Date2Vec submodule is not defined in the reference source;
    # this is a Time2Vec-style stand-in (linear + sine over date features,
    # lightly modulated by x_extend) matching the downstream slicing shapes.
    t = jnp.transpose(d2v_in[:, :, 0, :], (0, 2, 1))             # (B, L+LP, TF)
    e = t @ p['d2v_W'] + p['d2v_b']                              # (B, L+LP, D)
    e = jnp.concatenate([e[..., :1], jnp.sin(e[..., 1:])], axis=-1)
    xmod = jnp.tanh(jnp.mean(x_ext, axis=(1, -1)))               # (B,N,M)
    out = e[:, None, None, :, :] * (1.0 + 0.1 * xmod[..., None, None])
    return jnp.transpose(out, (0, 4, 1, 2, 3))                   # (B,D,N,M,L+LP)


def fusion(x_ext, d2v_x, d2v_y, top_value, p):
    # TODO(synk): Fusion_Module is not defined in the reference source; stand-in:
    # cross-attention from future-date embeddings to past-date embeddings,
    # values are date-modulated inputs, neighbor aggregation via weight_inextend.
    scale = 1.0 / jnp.sqrt(jnp.float32(D))
    logits = jnp.einsum('bdnmp,bdnml->bnmpl', d2v_y, d2v_x) * scale
    A = jax.nn.softmax(logits, axis=-1)                          # (B,N,M,LP,L)
    v = d2v_x * jnp.mean(x_ext, axis=1, keepdims=True)           # (B,D,N,M,L)
    ctx = jnp.einsum('bnmpl,bdnml->bdnmp', A, v)                 # (B,D,N,M,LP)
    pred = jnp.einsum('bdnmp,m->bdnp', ctx, p['weight_inextend'][:, 0])
    pred = jnp.transpose(pred, (0, 3, 2, 1))                     # (B,LP,N,D)
    return pred, A


def glu(x, p):
    a = x @ p['glu_W1'] + p['glu_b1']
    g = x @ p['glu_W2'] + p['glu_b2']
    return a * jax.nn.sigmoid(g)


def forward(p, inp, seq_time, pred_time):
    # adaptive adjacency (plain jnp; tiny)
    adj_adp = compute_adj_adp(p)

    # input normalization
    x_bn = bn_eval(inp, p['bn_g'], p['bn_b'])
    input_data = x_bn[:, :F]
    x = input_data

    # Input module (single fused Pallas encoder call)
    hidden = input_module(input_data, seq_time, p)
    conv_x = jnp.einsum('oi,binl->bonl', p['conv_in_W'], x) \
             + p['conv_in_b'][None, :, None, None]
    x = bn_eval(hidden + conv_x, p['bn_fus_g'], p['bn_fus_b'])   # (B,F,N,L)

    # Sample module
    top_value, index = jax.lax.top_k(adj_adp, M - 1)             # (N,M-1)
    x_ext = x[:, :, index]                                       # (B,F,N,M-1,L)
    x_ext = jnp.concatenate([x[:, :, :, None, :], x_ext], axis=-2)  # (B,F,N,M,L)

    d2v_in = jnp.concatenate([seq_time, pred_time], axis=-1)     # (B,TF,1,L+LP)

    # Date2Vec module
    d2v_out = date2vec(x_ext, d2v_in, p)                         # (B,D,N,M,L+LP)
    d2v_x = d2v_out[..., :L]
    d2v_y = d2v_out[..., L:]

    # Fusion + Output modules (eval path only; training loss branch omitted)
    pred, _A = fusion(x_ext, d2v_x, d2v_y, top_value, p)
    pred = glu(pred, p)                                          # (B,LP,N,F)
    return pred


# ----------------------------- deterministic params ------------------------
def init_params(key):
    ks = jax.random.split(key, 32)

    def rn(k, shape, s=0.1, dtype=jnp.float32):
        return (jax.random.normal(k, shape) * s).astype(dtype)

    p = {}
    p['time_in_day_emb'] = rn(ks[0], (TOD_SIZE, D))
    p['day_in_week_emb'] = rn(ks[1], (DOW_SIZE, D))
    p['memory_bank'] = rn(ks[2], (N, D))
    p['We1'] = rn(ks[3], (D, D))
    p['We2'] = rn(ks[4], (D, D))

    # time_series_emb_layer (1x1 conv) folded with the embedding pass-through
    # into one block matrix: W_in = [[W_ts, 0], [0, I_3D], [0, 0 (pad)]]
    W_ts = rn(ks[5], (F * L, D))
    b_ts = rn(ks[6], (1, D))
    W_in = jnp.zeros((CIN_PAD, H), jnp.float32)
    W_in = W_in.at[:F * L, :D].set(W_ts)
    W_in = W_in.at[F * L:F * L + 3 * D, D:].set(jnp.eye(3 * D, dtype=jnp.float32))
    p['W_in'] = W_in
    p['b_in'] = jnp.concatenate([b_ts, jnp.zeros((1, 3 * D), jnp.float32)],
                                axis=-1)

    # MLP + regression weights as bf16 (MXU operands); biases stay f32 (VPU)
    p['W1'] = rn(ks[7], (NUM_LAYER, H, H), dtype=jnp.bfloat16)
    p['b1'] = rn(ks[8], (NUM_LAYER, 1, H))
    p['W2'] = rn(ks[9], (NUM_LAYER, H, H), dtype=jnp.bfloat16)
    p['b2'] = rn(ks[10], (NUM_LAYER, 1, H))
    # regression weight / bias zero-padded to 128 output lanes (lane-dense vst)
    W_reg = jnp.zeros((H, OUT_PAD), jnp.float32)
    W_reg = W_reg.at[:, :OUT].set(rn(ks[11], (H, OUT)))
    p['W_reg'] = W_reg.astype(jnp.bfloat16)
    b_reg = jnp.zeros((1, OUT_PAD), jnp.float32)
    p['b_reg'] = b_reg.at[:, :OUT].set(rn(ks[12], (1, OUT)))

    p['bn_g'] = 1.0 + rn(ks[13], (F,))
    p['bn_b'] = rn(ks[14], (F,))
    p['bn_hidden_g'] = 1.0 + rn(ks[15], (F,))
    p['bn_hidden_b'] = rn(ks[16], (F,))
    p['bn_fus_g'] = 1.0 + rn(ks[17], (F,))
    p['bn_fus_b'] = rn(ks[18], (F,))
    p['conv_in_W'] = rn(ks[19], (F, F))
    p['conv_in_b'] = rn(ks[20], (F,))
    p['weight_inextend'] = rn(ks[21], (M, 1), s=1.0)
    p['d2v_W'] = rn(ks[22], (TF, D), s=0.5)
    p['d2v_b'] = rn(ks[23], (D,))
    p['glu_W1'] = rn(ks[24], (D, F))
    p['glu_b1'] = rn(ks[25], (F,))
    p['glu_W2'] = rn(ks[26], (D, F))
    p['glu_b2'] = rn(ks[27], (F,))
    return p


if __name__ == "__main__":
    key = jax.random.PRNGKey(0)
    kp, ki, ks, kt = jax.random.split(key, 4)
    params = init_params(kp)
    inp = jax.random.normal(ki, (B, F, N, L), dtype=jnp.float32)
    seq_time = jax.random.uniform(ks, (B, TF, 1, L), minval=-0.5, maxval=0.5,
                                  dtype=jnp.float32)
    pred_time = jax.random.uniform(kt, (B, TF, 1, LP), minval=-0.5, maxval=0.5,
                                   dtype=jnp.float32)

    out = jax.jit(forward)(params, inp, seq_time, pred_time)
    jax.block_until_ready(out)
    assert out.shape == (B, LP, N, F)
    assert bool(jnp.all(jnp.isfinite(out)))
    print("KERNEL_OK")
</pallas_src>

<mosaic_0001>
module attributes {stable_mosaic.version = 11 : i64} {
  func.func @_encoder_kernel(%arg0: i32, %arg1: memref<16x128xf32, #tpu.memory_space<vmem>>, %arg2: memref<128x128xf32, #tpu.memory_space<vmem>>, %arg3: memref<1x128xf32, #tpu.memory_space<vmem>>, %arg4: memref<3x128x128xbf16, #tpu.memory_space<vmem>>, %arg5: memref<3x1x128xf32, #tpu.memory_space<vmem>>, %arg6: memref<3x128x128xbf16, #tpu.memory_space<vmem>>, %arg7: memref<3x1x128xf32, #tpu.memory_space<vmem>>, %arg8: memref<128x128xbf16, #tpu.memory_space<vmem>>, %arg9: memref<1x128xf32, #tpu.memory_space<vmem>>, %arg10: memref<16x128xf32, #tpu.memory_space<vmem>>) attributes {dimension_semantics = [#tpu.dimension_semantics<arbitrary>], iteration_bounds = array<i64: 1>, scalar_prefetch = 0 : i64, scratch_operands = 0 : i64, tpu.core_type = #tpu.core_type<tc>, window_params = [{pipeline_mode = #tpu.pipeline_mode<synchronous>, transform_indices = @transform_0, window_bounds = array<i64: 16, 128>}, {pipeline_mode = #tpu.pipeline_mode<synchronous>, transform_indices = @transform_1, window_bounds = array<i64: 128, 128>}, {pipeline_mode = #tpu.pipeline_mode<synchronous>, transform_indices = @transform_2, window_bounds = array<i64: 1, 128>}, {pipeline_mode = #tpu.pipeline_mode<synchronous>, transform_indices = @transform_3, window_bounds = array<i64: 3, 128, 128>}, {pipeline_mode = #tpu.pipeline_mode<synchronous>, transform_indices = @transform_4, window_bounds = array<i64: 3, 1, 128>}, {pipeline_mode = #tpu.pipeline_mode<synchronous>, transform_indices = @transform_5, window_bounds = array<i64: 3, 128, 128>}, {pipeline_mode = #tpu.pipeline_mode<synchronous>, transform_indices = @transform_6, window_bounds = array<i64: 3, 1, 128>}, {pipeline_mode = #tpu.pipeline_mode<synchronous>, transform_indices = @transform_7, window_bounds = array<i64: 128, 128>}, {pipeline_mode = #tpu.pipeline_mode<synchronous>, transform_indices = @transform_8, window_bounds = array<i64: 1, 128>}, {pipeline_mode = #tpu.pipeline_mode<synchronous>, transform_indices = @transform_9, window_bounds = array<i64: 16, 128>}]} {
    %c0 = arith.constant 0 : index
    %c0_0 = arith.constant 0 : index
    %0 = vector.load %arg1[%c0, %c0_0] : memref<16x128xf32, #tpu.memory_space<vmem>>, vector<16x128xf32>
    %c0_1 = arith.constant 0 : index
    %c0_2 = arith.constant 0 : index
    %1 = vector.load %arg2[%c0_1, %c0_2] : memref<128x128xf32, #tpu.memory_space<vmem>>, vector<128x128xf32>
    %cst = arith.constant dense<0.000000e+00> : vector<16x128xf32>
    %2 = tpu.matmul %0, %1, %cst {dimension_numbers = #tpu.dot_dimension_numbers<[1], [0], [0], [1], [0, 0, 1, 1], [], []>} : vector<16x128xf32>, vector<128x128xf32>, vector<16x128xf32> -> vector<16x128xf32>
    %c0_3 = arith.constant 0 : index
    %c0_4 = arith.constant 0 : index
    %3 = vector.load %arg3[%c0_3, %c0_4] : memref<1x128xf32, #tpu.memory_space<vmem>>, vector<1x128xf32>
    %4 = vector.broadcast %3 : vector<1x128xf32> to vector<16x128xf32>
    %5 = arith.addf %2, %4 : vector<16x128xf32>
    %6 = arith.truncf %5 : vector<16x128xf32> to vector<16x128xbf16>
    %c0_5 = arith.constant 0 : index
    %c0_6 = arith.constant 0 : index
    %c0_7 = arith.constant 0 : index
    %7 = vector.load %arg4[%c0_5, %c0_6, %c0_7] : memref<3x128x128xbf16, #tpu.memory_space<vmem>>, vector<1x128x128xbf16>
    %8 = vector.shape_cast %7 : vector<1x128x128xbf16> to vector<128x128xbf16>
    %cst_8 = arith.constant dense<0.000000e+00> : vector<16x128xf32>
    %9 = tpu.matmul %6, %8, %cst_8 {dimension_numbers = #tpu.dot_dimension_numbers<[1], [0], [0], [1], [0, 0, 1, 1], [], []>} : vector<16x128xbf16>, vector<128x128xbf16>, vector<16x128xf32> -> vector<16x128xf32>
    %c0_9 = arith.constant 0 : index
    %c0_10 = arith.constant 0 : index
    %c0_11 = arith.constant 0 : index
    %10 = vector.load %arg5[%c0_9, %c0_10, %c0_11] : memref<3x1x128xf32, #tpu.memory_space<vmem>>, vector<1x1x128xf32>
    %11 = vector.shape_cast %10 : vector<1x1x128xf32> to vector<1x128xf32>
    %12 = vector.broadcast %11 : vector<1x128xf32> to vector<16x128xf32>
    %13 = arith.addf %9, %12 : vector<16x128xf32>
    %cst_12 = arith.constant 0.000000e+00 : f32
    %14 = vector.broadcast %cst_12 : f32 to vector<16x128xf32>
    %15 = arith.maximumf %13, %14 : vector<16x128xf32>
    %16 = arith.truncf %15 : vector<16x128xf32> to vector<16x128xbf16>
    %c0_13 = arith.constant 0 : index
    %c0_14 = arith.constant 0 : index
    %c0_15 = arith.constant 0 : index
    %17 = vector.load %arg6[%c0_13, %c0_14, %c0_15] : memref<3x128x128xbf16, #tpu.memory_space<vmem>>, vector<1x128x128xbf16>
    %18 = vector.shape_cast %17 : vector<1x128x128xbf16> to vector<128x128xbf16>
    %cst_16 = arith.constant dense<0.000000e+00> : vector<16x128xf32>
    %19 = tpu.matmul %16, %18, %cst_16 {dimension_numbers = #tpu.dot_dimension_numbers<[1], [0], [0], [1], [0, 0, 1, 1], [], []>} : vector<16x128xbf16>, vector<128x128xbf16>, vector<16x128xf32> -> vector<16x128xf32>
    %c0_17 = arith.constant 0 : index
    %c0_18 = arith.constant 0 : index
    %c0_19 = arith.constant 0 : index
    %20 = vector.load %arg7[%c0_17, %c0_18, %c0_19] : memref<3x1x128xf32, #tpu.memory_space<vmem>>, vector<1x1x128xf32>
    %21 = vector.shape_cast %20 : vector<1x1x128xf32> to vector<1x128xf32>
    %22 = vector.broadcast %21 : vector<1x128xf32> to vector<16x128xf32>
    %23 = arith.addf %19, %22 : vector<16x128xf32>
    %24 = arith.addf %5, %23 : vector<16x128xf32>
    %25 = arith.truncf %24 : vector<16x128xf32> to vector<16x128xbf16>
    %c1 = arith.constant 1 : index
    %c0_20 = arith.constant 0 : index
    %c0_21 = arith.constant 0 : index
    %26 = vector.load %arg4[%c1, %c0_20, %c0_21] : memref<3x128x128xbf16, #tpu.memory_space<vmem>>, vector<1x128x128xbf16>
    %27 = vector.shape_cast %26 : vector<1x128x128xbf16> to vector<128x128xbf16>
    %cst_22 = arith.constant dense<0.000000e+00> : vector<16x128xf32>
    %28 = tpu.matmul %25, %27, %cst_22 {dimension_numbers = #tpu.dot_dimension_numbers<[1], [0], [0], [1], [0, 0, 1, 1], [], []>} : vector<16x128xbf16>, vector<128x128xbf16>, vector<16x128xf32> -> vector<16x128xf32>
    %c1_23 = arith.constant 1 : index
    %c0_24 = arith.constant 0 : index
    %c0_25 = arith.constant 0 : index
    %29 = vector.load %arg5[%c1_23, %c0_24, %c0_25] : memref<3x1x128xf32, #tpu.memory_space<vmem>>, vector<1x1x128xf32>
    %30 = vector.shape_cast %29 : vector<1x1x128xf32> to vector<1x128xf32>
    %31 = vector.broadcast %30 : vector<1x128xf32> to vector<16x128xf32>
    %32 = arith.addf %28, %31 : vector<16x128xf32>
    %cst_26 = arith.constant 0.000000e+00 : f32
    %33 = vector.broadcast %cst_26 : f32 to vector<16x128xf32>
    %34 = arith.maximumf %32, %33 : vector<16x128xf32>
    %35 = arith.truncf %34 : vector<16x128xf32> to vector<16x128xbf16>
    %c1_27 = arith.constant 1 : index
    %c0_28 = arith.constant 0 : index
    %c0_29 = arith.constant 0 : index
    %36 = vector.load %arg6[%c1_27, %c0_28, %c0_29] : memref<3x128x128xbf16, #tpu.memory_space<vmem>>, vector<1x128x128xbf16>
    %37 = vector.shape_cast %36 : vector<1x128x128xbf16> to vector<128x128xbf16>
    %cst_30 = arith.constant dense<0.000000e+00> : vector<16x128xf32>
    %38 = tpu.matmul %35, %37, %cst_30 {dimension_numbers = #tpu.dot_dimension_numbers<[1], [0], [0], [1], [0, 0, 1, 1], [], []>} : vector<16x128xbf16>, vector<128x128xbf16>, vector<16x128xf32> -> vector<16x128xf32>
    %c1_31 = arith.constant 1 : index
    %c0_32 = arith.constant 0 : index
    %c0_33 = arith.constant 0 : index
    %39 = vector.load %arg7[%c1_31, %c0_32, %c0_33] : memref<3x1x128xf32, #tpu.memory_space<vmem>>, vector<1x1x128xf32>
    %40 = vector.shape_cast %39 : vector<1x1x128xf32> to vector<1x128xf32>
    %41 = vector.broadcast %40 : vector<1x128xf32> to vector<16x128xf32>
    %42 = arith.addf %38, %41 : vector<16x128xf32>
    %43 = arith.addf %24, %42 : vector<16x128xf32>
    %44 = arith.truncf %43 : vector<16x128xf32> to vector<16x128xbf16>
    %c2 = arith.constant 2 : index
    %c0_34 = arith.constant 0 : index
    %c0_35 = arith.constant 0 : index
    %45 = vector.load %arg4[%c2, %c0_34, %c0_35] : memref<3x128x128xbf16, #tpu.memory_space<vmem>>, vector<1x128x128xbf16>
    %46 = vector.shape_cast %45 : vector<1x128x128xbf16> to vector<128x128xbf16>
    %cst_36 = arith.constant dense<0.000000e+00> : vector<16x128xf32>
    %47 = tpu.matmul %44, %46, %cst_36 {dimension_numbers = #tpu.dot_dimension_numbers<[1], [0], [0], [1], [0, 0, 1, 1], [], []>} : vector<16x128xbf16>, vector<128x128xbf16>, vector<16x128xf32> -> vector<16x128xf32>
    %c2_37 = arith.constant 2 : index
    %c0_38 = arith.constant 0 : index
    %c0_39 = arith.constant 0 : index
    %48 = vector.load %arg5[%c2_37, %c0_38, %c0_39] : memref<3x1x128xf32, #tpu.memory_space<vmem>>, vector<1x1x128xf32>
    %49 = vector.shape_cast %48 : vector<1x1x128xf32> to vector<1x128xf32>
    %50 = vector.broadcast %49 : vector<1x128xf32> to vector<16x128xf32>
    %51 = arith.addf %47, %50 : vector<16x128xf32>
    %cst_40 = arith.constant 0.000000e+00 : f32
    %52 = vector.broadcast %cst_40 : f32 to vector<16x128xf32>
    %53 = arith.maximumf %51, %52 : vector<16x128xf32>
    %54 = arith.truncf %53 : vector<16x128xf32> to vector<16x128xbf16>
    %c2_41 = arith.constant 2 : index
    %c0_42 = arith.constant 0 : index
    %c0_43 = arith.constant 0 : index
    %55 = vector.load %arg6[%c2_41, %c0_42, %c0_43] : memref<3x128x128xbf16, #tpu.memory_space<vmem>>, vector<1x128x128xbf16>
    %56 = vector.shape_cast %55 : vector<1x128x128xbf16> to vector<128x128xbf16>
    %cst_44 = arith.constant dense<0.000000e+00> : vector<16x128xf32>
    %57 = tpu.matmul %54, %56, %cst_44 {dimension_numbers = #tpu.dot_dimension_numbers<[1], [0], [0], [1], [0, 0, 1, 1], [], []>} : vector<16x128xbf16>, vector<128x128xbf16>, vector<16x128xf32> -> vector<16x128xf32>
    %c2_45 = arith.constant 2 : index
    %c0_46 = arith.constant 0 : index
    %c0_47 = arith.constant 0 : index
    %58 = vector.load %arg7[%c2_45, %c0_46, %c0_47] : memref<3x1x128xf32, #tpu.memory_space<vmem>>, vector<1x1x128xf32>
    %59 = vector.shape_cast %58 : vector<1x1x128xf32> to vector<1x128xf32>
    %60 = vector.broadcast %59 : vector<1x128xf32> to vector<16x128xf32>
    %61 = arith.addf %57, %60 : vector<16x128xf32>
    %62 = arith.addf %43, %61 : vector<16x128xf32>
    %63 = arith.truncf %62 : vector<16x128xf32> to vector<16x128xbf16>
    %c0_48 = arith.constant 0 : index
    %c0_49 = arith.constant 0 : index
    %64 = vector.load %arg8[%c0_48, %c0_49] : memref<128x128xbf16, #tpu.memory_space<vmem>>, vector<128x128xbf16>
    %cst_50 = arith.constant dense<0.000000e+00> : vector<16x128xf32>
    %65 = tpu.matmul %63, %64, %cst_50 {dimension_numbers = #tpu.dot_dimension_numbers<[1], [0], [0], [1], [0, 0, 1, 1], [], []>} : vector<16x128xbf16>, vector<128x128xbf16>, vector<16x128xf32> -> vector<16x128xf32>
    %c0_51 = arith.constant 0 : index
    %c0_52 = arith.constant 0 : index
    %66 = vector.load %arg9[%c0_51, %c0_52] : memref<1x128xf32, #tpu.memory_space<vmem>>, vector<1x128xf32>
    %67 = vector.broadcast %66 : vector<1x128xf32> to vector<16x128xf32>
    %68 = arith.addf %65, %67 : vector<16x128xf32>
    %c0_53 = arith.constant 0 : index
    %c0_54 = arith.constant 0 : index
    %69 = vector.load %arg10[%c0_53, %c0_54] : memref<16x128xf32, #tpu.memory_space<vmem>>, vector<16x128xf32>
    tpu.vector_store %arg10[%c0_53, %c0_54], %68 {strides = array<i32>} : memref<16x128xf32, #tpu.memory_space<vmem>>, vector<16x128xf32>,
    return
  }
  func.func @transform_0(%arg0: i32) -> (i32, i32) {
    %c0_i32 = arith.constant 0 : i32
    %c0_i32_0 = arith.constant 0 : i32
    %c0_i32_1 = arith.constant 0 : i32
    return %c0_i32, %c0_i32_0 : i32, i32
  }
  func.func @transform_1(%arg0: i32) -> (i32, i32) {
    %c0_i32 = arith.constant 0 : i32
    %c0_i32_0 = arith.constant 0 : i32
    %c0_i32_1 = arith.constant 0 : i32
    return %c0_i32, %c0_i32_0 : i32, i32
  }
  func.func @transform_2(%arg0: i32) -> (i32, i32) {
    %c0_i32 = arith.constant 0 : i32
    %c0_i32_0 = arith.constant 0 : i32
    %c0_i32_1 = arith.constant 0 : i32
    return %c0_i32, %c0_i32_0 : i32, i32
  }
  func.func @transform_3(%arg0: i32) -> (i32, i32, i32) {
    %c0_i32 = arith.constant 0 : i32
    %c0_i32_0 = arith.constant 0 : i32
    %c0_i32_1 = arith.constant 0 : i32
    %c0_i32_2 = arith.constant 0 : i32
    return %c0_i32, %c0_i32_0, %c0_i32_1 : i32, i32, i32
  }
  func.func @transform_4(%arg0: i32) -> (i32, i32, i32) {
    %c0_i32 = arith.constant 0 : i32
    %c0_i32_0 = arith.constant 0 : i32
    %c0_i32_1 = arith.constant 0 : i32
    %c0_i32_2 = arith.constant 0 : i32
    return %c0_i32, %c0_i32_0, %c0_i32_1 : i32, i32, i32
  }
  func.func @transform_5(%arg0: i32) -> (i32, i32, i32) {
    %c0_i32 = arith.constant 0 : i32
    %c0_i32_0 = arith.constant 0 : i32
    %c0_i32_1 = arith.constant 0 : i32
    %c0_i32_2 = arith.constant 0 : i32
    return %c0_i32, %c0_i32_0, %c0_i32_1 : i32, i32, i32
  }
  func.func @transform_6(%arg0: i32) -> (i32, i32, i32) {
    %c0_i32 = arith.constant 0 : i32
    %c0_i32_0 = arith.constant 0 : i32
    %c0_i32_1 = arith.constant 0 : i32
    %c0_i32_2 = arith.constant 0 : i32
    return %c0_i32, %c0_i32_0, %c0_i32_1 : i32, i32, i32
  }
  func.func @transform_7(%arg0: i32) -> (i32, i32) {
    %c0_i32 = arith.constant 0 : i32
    %c0_i32_0 = arith.constant 0 : i32
    %c0_i32_1 = arith.constant 0 : i32
    return %c0_i32, %c0_i32_0 : i32, i32
  }
  func.func @transform_8(%arg0: i32) -> (i32, i32) {
    %c0_i32 = arith.constant 0 : i32
    %c0_i32_0 = arith.constant 0 : i32
    %c0_i32_1 = arith.constant 0 : i32
    return %c0_i32, %c0_i32_0 : i32, i32
  }
  func.func @transform_9(%arg0: i32) -> (i32, i32) {
    %c0_i32 = arith.constant 0 : i32
    %c0_i32_0 = arith.constant 0 : i32
    %c0_i32_1 = arith.constant 0 : i32
    return %c0_i32, %c0_i32_0 : i32, i32
  }
}

</mosaic_0001>

<llo_original>
// kernel: forward.1
$region0: #{forward.1}
  #allocation0 [shape = 'u32[]', space=smem, size = 0x4, offset = 0x4, fixed_abs, tag = 'smem constant byte address 0x4 - core index']
  #allocation1 [shape = 'u32[72,128]{1,0:T(1,128)}', space=vmem, size = 0x9000, scoped, tag = 'internal scratch']
  %s0 = inlined_call_operand.vmem [shape: f32[16,128], index: 0, kind: input, shape index: {}]
  %s1 = inlined_call_operand.vmem [shape: f32[128,128], index: 1, kind: input, shape index: {}]
  %s2 = inlined_call_operand.vmem [shape: f32[1,128], index: 2, kind: input, shape index: {}]
  %s3 = inlined_call_operand.vmem [shape: bf16[3,128,128], index: 3, kind: input, shape index: {}]
  %s4 = inlined_call_operand.vmem [shape: f32[3,1,128], index: 4, kind: input, shape index: {}]
  %s5 = inlined_call_operand.vmem [shape: bf16[3,128,128], index: 5, kind: input, shape index: {}]
  %s6 = inlined_call_operand.vmem [shape: f32[3,1,128], index: 6, kind: input, shape index: {}]
  %s7 = inlined_call_operand.vmem [shape: bf16[128,128], index: 7, kind: input, shape index: {}]
  %s8 = inlined_call_operand.vmem [shape: f32[1,128], index: 8, kind: input, shape index: {}]
  %s9 = inlined_call_operand.vmem [shape: f32[16,128], index: 9, kind: output, shape index: {}]
  %s10 = sld [smem:[#allocation0]]
  $region46: #{forward.1} parent=0
    _
  %s12 = ssub.s32 1, %s10
  %s13 = scalar_select 0, %s12, %s10
  // Predicated region
  $region2: #{forward.1} parent=0 // pred_check
    _
  $region3: #{forward.1} parent=0 // pred_check_branch
    %15 = sbr.rel (0) target = $region5
  $region4: #{forward.1} parent=0 // pred_region
    _
  $region5: #{forward.1} parent=0 // pred_fallthru
    _
  // Predicated region
  $region6: #{forward.1} parent=0 // pred_check
    _
  $region7: #{forward.1} parent=0 // pred_check_branch
    %17 = sbr.rel (0) target = $region9
  $region8: #{forward.1} parent=0 // pred_region
    _
  $region9: #{forward.1} parent=0 // pred_fallthru
    _
  // Predicated region
  $region10: #{forward.1} parent=0 // pred_check
    _
  $region11: #{forward.1} parent=0 // pred_check_branch
    %19 = sbr.rel (0) target = $region13
  $region12: #{forward.1} parent=0 // pred_region
    _
  $region13: #{forward.1} parent=0 // pred_fallthru
    _
  // Predicated region
  $region14: #{forward.1} parent=0 // pred_check
    _
  $region15: #{forward.1} parent=0 // pred_check_branch
    %21 = sbr.rel (0) target = $region17
  $region16: #{forward.1} parent=0 // pred_region
    _
  $region17: #{forward.1} parent=0 // pred_fallthru
    _
  // Predicated region
  $region18: #{forward.1} parent=0 // pred_check
    _
  $region19: #{forward.1} parent=0 // pred_check_branch
    %23 = sbr.rel (0) target = $region21
  $region20: #{forward.1} parent=0 // pred_region
    _
  $region21: #{forward.1} parent=0 // pred_fallthru
    _
  // Predicated region
  $region22: #{forward.1} parent=0 // pred_check
    _
  $region23: #{forward.1} parent=0 // pred_check_branch
    %25 = sbr.rel (0) target = $region25
  $region24: #{forward.1} parent=0 // pred_region
    _
  $region25: #{forward.1} parent=0 // pred_fallthru
    _
  // Predicated region
  $region26: #{forward.1} parent=0 // pred_check
    _
  $region27: #{forward.1} parent=0 // pred_check_branch
    %27 = sbr.rel (0) target = $region29
  $region28: #{forward.1} parent=0 // pred_region
    _
  $region29: #{forward.1} parent=0 // pred_fallthru
    _
  // Predicated region
  $region30: #{forward.1} parent=0 // pred_check
    _
  $region31: #{forward.1} parent=0 // pred_check_branch
    %29 = sbr.rel (0) target = $region33
  $region32: #{forward.1} parent=0 // pred_region
    _
  $region33: #{forward.1} parent=0 // pred_fallthru
    _
  // Predicated region
  $region34: #{forward.1} parent=0 // pred_check
    _
  $region35: #{forward.1} parent=0 // pred_check_branch
    %31 = sbr.rel (0) target = $region37
  $region36: #{forward.1} parent=0 // pred_region
    _
  $region37: #{forward.1} parent=0 // pred_fallthru
    _
  %v32 = vld [vmem:[%s0] sm:$0xff]
  %v33 = vld [vmem:[%s0 + $0x8] sm:$0xff]
  %v34 = vld [vmem:[%s1] sm:$0xff]
  %v35 = vld [vmem:[%s1 + $0x8] sm:$0xff]
  %v36 = vld [vmem:[%s1 + $0x10] sm:$0xff]
  %v37 = vld [vmem:[%s1 + $0x18] sm:$0xff]
  %v38 = vld [vmem:[%s1 + $0x20] sm:$0xff]
  %v39 = vld [vmem:[%s1 + $0x28] sm:$0xff]
  %v40 = vld [vmem:[%s1 + $0x30] sm:$0xff]
  %v41 = vld [vmem:[%s1 + $0x38] sm:$0xff]
  %v42 = vld [vmem:[%s1 + $0x40] sm:$0xff]
  %v43 = vld [vmem:[%s1 + $0x48] sm:$0xff]
  %v44 = vld [vmem:[%s1 + $0x50] sm:$0xff]
  %v45 = vld [vmem:[%s1 + $0x58] sm:$0xff]
  %v46 = vld [vmem:[%s1 + $0x60] sm:$0xff]
  %v47 = vld [vmem:[%s1 + $0x68] sm:$0xff]
  %v48 = vld [vmem:[%s1 + $0x70] sm:$0xff]
  %v49 = vld [vmem:[%s1 + $0x78] sm:$0xff]
  %v50 = vld [vmem:[%s2] sm:$0x1]
  %v52 = vperm.slane %v50, 0
  %54 = vmatpush.msra.mxu0 %v49
  %55 = vmatpush.msra.mxu0 %v48
  %56 = vmatpush.msra.mxu0 %v47
  %57 = vmatpush.msra.mxu0 %v46
  %58 = vmatpush.msra.mxu0 %v45
  %59 = vmatpush.msra.mxu0 %v44
  %60 = vmatpush.msra.mxu0 %v43
  %61 = vmatpush.msra.mxu0 %v42
  %62 = vmatpush.msra.mxu0 %v41
  %63 = vmatpush.msra.mxu0 %v40
  %64 = vmatpush.msra.mxu0 %v39
  %65 = vmatpush.msra.mxu0 %v38
  %66 = vmatpush.msra.mxu0 %v37
  %67 = vmatpush.msra.mxu0 %v36
  %68 = vmatpush.msra.mxu0 %v35
  %69 = vmatpush.msra.mxu0 %v34
  %70 = vmatmul.f32.gmra.mxu0 %v32
  %v71 = vpop.f32.mrf.mxu0
  %v72 = vadd.f32 %v52, %v71
  %73 = vmatmul.f32.gmra.mxu0 %v33
  %v74 = vpop.f32.mrf.mxu0
  %v75 = vadd.f32 %v52, %v74
  %76 = vdwg.mxu0
  %v77 = vpack.c.bf16 %v75, %v72
  %v78 = vld [vmem:[%s3] sm:$0xf]
  %v79 = vld [vmem:[%s3 + $0x4] sm:$0xf]
  %v80 = vld [vmem:[%s3 + $0x8] sm:$0xf]
  %v81 = vld [vmem:[%s3 + $0xc] sm:$0xf]
  %v82 = vld [vmem:[%s3 + $0x10] sm:$0xf]
  %v83 = vld [vmem:[%s3 + $0x14] sm:$0xf]
  %v84 = vld [vmem:[%s3 + $0x18] sm:$0xf]
  %v85 = vld [vmem:[%s3 + $0x1c] sm:$0xf]
  %v86 = vld [vmem:[%s3 + $0x20] sm:$0xf]
  %v87 = vld [vmem:[%s3 + $0x24] sm:$0xf]
  %v88 = vld [vmem:[%s3 + $0x28] sm:$0xf]
  %v89 = vld [vmem:[%s3 + $0x2c] sm:$0xf]
  %v90 = vld [vmem:[%s3 + $0x30] sm:$0xf]
  %v91 = vld [vmem:[%s3 + $0x34] sm:$0xf]
  %v92 = vld [vmem:[%s3 + $0x38] sm:$0xf]
  %v93 = vld [vmem:[%s3 + $0x3c] sm:$0xf]
  %v94 = vld [vmem:[%s4] sm:$0x1]
  %v96 = vperm.slane %v94, 0
  %v114 = vunpack.c.l.b16 %v78
  %v115 = vunpack.c.l.b16 %v79
  %v116 = vunpack.c.l.b16 %v80
  %v117 = vunpack.c.l.b16 %v81
  %v118 = vunpack.c.l.b16 %v82
  %v119 = vunpack.c.l.b16 %v83
  %v120 = vunpack.c.l.b16 %v84
  %v121 = vunpack.c.l.b16 %v85
  %v122 = vunpack.c.l.b16 %v86
  %v123 = vunpack.c.l.b16 %v87
  %v124 = vunpack.c.l.b16 %v88
  %v125 = vunpack.c.l.b16 %v89
  %v126 = vunpack.c.l.b16 %v90
  %v127 = vunpack.c.l.b16 %v91
  %v128 = vunpack.c.l.b16 %v92
  %v129 = vunpack.c.l.b16 %v93
  %v130 = vpack.c.b16 %v115, %v114
  %v131 = vpack.c.b16 %v117, %v116
  %v132 = vpack.c.b16 %v119, %v118
  %v133 = vpack.c.b16 %v121, %v120
  %v134 = vpack.c.b16 %v123, %v122
  %v135 = vpack.c.b16 %v125, %v124
  %v136 = vpack.c.b16 %v127, %v126
  %v137 = vpack.c.b16 %v129, %v128
  %146 = vmatpush.bf16.msra.mxu0 %v137
  %147 = vmatpush.bf16.msra.mxu0 %v136
  %148 = vmatpush.bf16.msra.mxu0 %v135
  %149 = vmatpush.bf16.msra.mxu0 %v134
  %150 = vmatpush.bf16.msra.mxu0 %v133
  %151 = vmatpush.bf16.msra.mxu0 %v132
  %152 = vmatpush.bf16.msra.mxu0 %v131
  %153 = vmatpush.bf16.msra.mxu0 %v130
  %154 = vmatmul.bf16.gmra.mxu0 %v77
  %v155 = vpop.f32.mrf.mxu0
  %v156 = vadd.f32 %v96, %v155
  %v157 = vpop.f32.mrf.mxu0
  %v158 = vadd.f32 %v96, %v157
  %159 = vdwg.mxu0
  %v160 = vmax.f32 %v156, 0.0
  %v161 = vmax.f32 %v158, 0.0
  %v162 = vpack.c.bf16 %v161, %v160
  %v163 = vld [vmem:[%s5] sm:$0xf]
  %v164 = vld [vmem:[%s5 + $0x4] sm:$0xf]
  %v165 = vld [vmem:[%s5 + $0x8] sm:$0xf]
  %v166 = vld [vmem:[%s5 + $0xc] sm:$0xf]
  %v167 = vld [vmem:[%s5 + $0x10] sm:$0xf]
  %v168 = vld [vmem:[%s5 + $0x14] sm:$0xf]
  %v169 = vld [vmem:[%s5 + $0x18] sm:$0xf]
  %v170 = vld [vmem:[%s5 + $0x1c] sm:$0xf]
  %v171 = vld [vmem:[%s5 + $0x20] sm:$0xf]
  %v172 = vld [vmem:[%s5 + $0x24] sm:$0xf]
  %v173 = vld [vmem:[%s5 + $0x28] sm:$0xf]
  %v174 = vld [vmem:[%s5 + $0x2c] sm:$0xf]
  %v175 = vld [vmem:[%s5 + $0x30] sm:$0xf]
  %v176 = vld [vmem:[%s5 + $0x34] sm:$0xf]
  %v177 = vld [vmem:[%s5 + $0x38] sm:$0xf]
  %v178 = vld [vmem:[%s5 + $0x3c] sm:$0xf]
  %v179 = vld [vmem:[%s6] sm:$0x1]
  %v181 = vperm.slane %v179, 0
  %v199 = vunpack.c.l.b16 %v163
  %v200 = vunpack.c.l.b16 %v164
  %v201 = vunpack.c.l.b16 %v165
  %v202 = vunpack.c.l.b16 %v166
  %v203 = vunpack.c.l.b16 %v167
  %v204 = vunpack.c.l.b16 %v168
  %v205 = vunpack.c.l.b16 %v169
  %v206 = vunpack.c.l.b16 %v170
  %v207 = vunpack.c.l.b16 %v171
  %v208 = vunpack.c.l.b16 %v172
  %v209 = vunpack.c.l.b16 %v173
  %v210 = vunpack.c.l.b16 %v174
  %v211 = vunpack.c.l.b16 %v175
  %v212 = vunpack.c.l.b16 %v176
  %v213 = vunpack.c.l.b16 %v177
  %v214 = vunpack.c.l.b16 %v178
  %v215 = vpack.c.b16 %v200, %v199
  %v216 = vpack.c.b16 %v202, %v201
  %v217 = vpack.c.b16 %v204, %v203
  %v218 = vpack.c.b16 %v206, %v205
  %v219 = vpack.c.b16 %v208, %v207
  %v220 = vpack.c.b16 %v210, %v209
  %v221 = vpack.c.b16 %v212, %v211
  %v222 = vpack.c.b16 %v214, %v213
  %231 = vmatpush.bf16.msra.mxu0 %v222
  %232 = vmatpush.bf16.msra.mxu0 %v221
  %233 = vmatpush.bf16.msra.mxu0 %v220
  %234 = vmatpush.bf16.msra.mxu0 %v219
  %235 = vmatpush.bf16.msra.mxu0 %v218
  %236 = vmatpush.bf16.msra.mxu0 %v217
  %237 = vmatpush.bf16.msra.mxu0 %v216
  %238 = vmatpush.bf16.msra.mxu0 %v215
  %239 = vmatmul.bf16.gmra.mxu0 %v162
  %v240 = vpop.f32.mrf.mxu0
  %v241 = vadd.f32 %v181, %v240
  %v242 = vpop.f32.mrf.mxu0
  %v243 = vadd.f32 %v181, %v242
  %244 = vdwg.mxu0
  %v245 = vadd.f32 %v72, %v241
  %v246 = vadd.f32 %v75, %v243
  %v247 = vpack.c.bf16 %v246, %v245
  %s248 = scalar_lea.vmem %s3, 64
  %v249 = vld [vmem:[%s248] sm:$0xf]
  %v250 = vld [vmem:[%s248 + $0x4] sm:$0xf]
  %v251 = vld [vmem:[%s248 + $0x8] sm:$0xf]
  %v252 = vld [vmem:[%s248 + $0xc] sm:$0xf]
  %v253 = vld [vmem:[%s248 + $0x10] sm:$0xf]
  %v254 = vld [vmem:[%s248 + $0x14] sm:$0xf]
  %v255 = vld [vmem:[%s248 + $0x18] sm:$0xf]
  %v256 = vld [vmem:[%s248 + $0x1c] sm:$0xf]
  %v257 = vld [vmem:[%s248 + $0x20] sm:$0xf]
  %v258 = vld [vmem:[%s248 + $0x24] sm:$0xf]
  %v259 = vld [vmem:[%s248 + $0x28] sm:$0xf]
  %v260 = vld [vmem:[%s248 + $0x2c] sm:$0xf]
  %v261 = vld [vmem:[%s248 + $0x30] sm:$0xf]
  %v262 = vld [vmem:[%s248 + $0x34] sm:$0xf]
  %v263 = vld [vmem:[%s248 + $0x38] sm:$0xf]
  %v264 = vld [vmem:[%s248 + $0x3c] sm:$0xf]
  %s265 = scalar_lea.vmem %s4, 1
  %v266 = vld [vmem:[%s265] sm:$0x1]
  %v268 = vperm.slane %v266, 0
  %v286 = vunpack.c.l.b16 %v249
  %v287 = vunpack.c.l.b16 %v250
  %v288 = vunpack.c.l.b16 %v251
  %v289 = vunpack.c.l.b16 %v252
  %v290 = vunpack.c.l.b16 %v253
  %v291 = vunpack.c.l.b16 %v254
  %v292 = vunpack.c.l.b16 %v255
  %v293 = vunpack.c.l.b16 %v256
  %v294 = vunpack.c.l.b16 %v257
  %v295 = vunpack.c.l.b16 %v258
  %v296 = vunpack.c.l.b16 %v259
  %v297 = vunpack.c.l.b16 %v260
  %v298 = vunpack.c.l.b16 %v261
  %v299 = vunpack.c.l.b16 %v262
  %v300 = vunpack.c.l.b16 %v263
  %v301 = vunpack.c.l.b16 %v264
  %v302 = vpack.c.b16 %v287, %v286
  %v303 = vpack.c.b16 %v289, %v288
  %v304 = vpack.c.b16 %v291, %v290
  %v305 = vpack.c.b16 %v293, %v292
  %v306 = vpack.c.b16 %v295, %v294
  %v307 = vpack.c.b16 %v297, %v296
  %v308 = vpack.c.b16 %v299, %v298
  %v309 = vpack.c.b16 %v301, %v300
  %318 = vmatpush.bf16.msra.mxu0 %v309
  %319 = vmatpush.bf16.msra.mxu0 %v308
  %320 = vmatpush.bf16.msra.mxu0 %v307
  %321 = vmatpush.bf16.msra.mxu0 %v306
  %322 = vmatpush.bf16.msra.mxu0 %v305
  %323 = vmatpush.bf16.msra.mxu0 %v304
  %324 = vmatpush.bf16.msra.mxu0 %v303
  %325 = vmatpush.bf16.msra.mxu0 %v302
  %326 = vmatmul.bf16.gmra.mxu0 %v247
  %v327 = vpop.f32.mrf.mxu0
  %v328 = vadd.f32 %v268, %v327
  %v329 = vpop.f32.mrf.mxu0
  %v330 = vadd.f32 %v268, %v329
  %331 = vdwg.mxu0
  %v332 = vmax.f32 %v328, 0.0
  %v333 = vmax.f32 %v330, 0.0
  %v334 = vpack.c.bf16 %v333, %v332
  %s335 = scalar_lea.vmem %s5, 64
  %v336 = vld [vmem:[%s335] sm:$0xf]
  %v337 = vld [vmem:[%s335 + $0x4] sm:$0xf]
  %v338 = vld [vmem:[%s335 + $0x8] sm:$0xf]
  %v339 = vld [vmem:[%s335 + $0xc] sm:$0xf]
  %v340 = vld [vmem:[%s335 + $0x10] sm:$0xf]
  %v341 = vld [vmem:[%s335 + $0x14] sm:$0xf]
  %v342 = vld [vmem:[%s335 + $0x18] sm:$0xf]
  %v343 = vld [vmem:[%s335 + $0x1c] sm:$0xf]
  %v344 = vld [vmem:[%s335 + $0x20] sm:$0xf]
  %v345 = vld [vmem:[%s335 + $0x24] sm:$0xf]
  %v346 = vld [vmem:[%s335 + $0x28] sm:$0xf]
  %v347 = vld [vmem:[%s335 + $0x2c] sm:$0xf]
  %v348 = vld [vmem:[%s335 + $0x30] sm:$0xf]
  %v349 = vld [vmem:[%s335 + $0x34] sm:$0xf]
  %v350 = vld [vmem:[%s335 + $0x38] sm:$0xf]
  %v351 = vld [vmem:[%s335 + $0x3c] sm:$0xf]
  %s352 = scalar_lea.vmem %s6, 1
  %v353 = vld [vmem:[%s352] sm:$0x1]
  %v355 = vperm.slane %v353, 0
  %v373 = vunpack.c.l.b16 %v336
  %v374 = vunpack.c.l.b16 %v337
  %v375 = vunpack.c.l.b16 %v338
  %v376 = vunpack.c.l.b16 %v339
  %v377 = vunpack.c.l.b16 %v340
  %v378 = vunpack.c.l.b16 %v341
  %v379 = vunpack.c.l.b16 %v342
  %v380 = vunpack.c.l.b16 %v343
  %v381 = vunpack.c.l.b16 %v344
  %v382 = vunpack.c.l.b16 %v345
  %v383 = vunpack.c.l.b16 %v346
  %v384 = vunpack.c.l.b16 %v347
  %v385 = vunpack.c.l.b16 %v348
  %v386 = vunpack.c.l.b16 %v349
  %v387 = vunpack.c.l.b16 %v350
  %v388 = vunpack.c.l.b16 %v351
  %v389 = vpack.c.b16 %v374, %v373
  %v390 = vpack.c.b16 %v376, %v375
  %v391 = vpack.c.b16 %v378, %v377
  %v392 = vpack.c.b16 %v380, %v379
  %v393 = vpack.c.b16 %v382, %v381
  %v394 = vpack.c.b16 %v384, %v383
  %v395 = vpack.c.b16 %v386, %v385
  %v396 = vpack.c.b16 %v388, %v387
  %405 = vmatpush.bf16.msra.mxu0 %v396
  %406 = vmatpush.bf16.msra.mxu0 %v395
  %407 = vmatpush.bf16.msra.mxu0 %v394
  %408 = vmatpush.bf16.msra.mxu0 %v393
  %409 = vmatpush.bf16.msra.mxu0 %v392
  %410 = vmatpush.bf16.msra.mxu0 %v391
  %411 = vmatpush.bf16.msra.mxu0 %v390
  %412 = vmatpush.bf16.msra.mxu0 %v389
  %413 = vmatmul.bf16.gmra.mxu0 %v334
  %v414 = vpop.f32.mrf.mxu0
  %v415 = vadd.f32 %v355, %v414
  %v416 = vpop.f32.mrf.mxu0
  %v417 = vadd.f32 %v355, %v416
  %418 = vdwg.mxu0
  %v419 = vadd.f32 %v245, %v415
  %v420 = vadd.f32 %v246, %v417
  %v421 = vpack.c.bf16 %v420, %v419
  %s422 = scalar_lea.vmem %s3, 128
  %v423 = vld [vmem:[%s422] sm:$0xf]
  %v424 = vld [vmem:[%s422 + $0x4] sm:$0xf]
  %v425 = vld [vmem:[%s422 + $0x8] sm:$0xf]
  %v426 = vld [vmem:[%s422 + $0xc] sm:$0xf]
  %v427 = vld [vmem:[%s422 + $0x10] sm:$0xf]
  %v428 = vld [vmem:[%s422 + $0x14] sm:$0xf]
  %v429 = vld [vmem:[%s422 + $0x18] sm:$0xf]
  %v430 = vld [vmem:[%s422 + $0x1c] sm:$0xf]
  %v431 = vld [vmem:[%s422 + $0x20] sm:$0xf]
  %v432 = vld [vmem:[%s422 + $0x24] sm:$0xf]
  %v433 = vld [vmem:[%s422 + $0x28] sm:$0xf]
  %v434 = vld [vmem:[%s422 + $0x2c] sm:$0xf]
  %v435 = vld [vmem:[%s422 + $0x30] sm:$0xf]
  %v436 = vld [vmem:[%s422 + $0x34] sm:$0xf]
  %v437 = vld [vmem:[%s422 + $0x38] sm:$0xf]
  %v438 = vld [vmem:[%s422 + $0x3c] sm:$0xf]
  %s439 = scalar_lea.vmem %s4, 2
  %v440 = vld [vmem:[%s439] sm:$0x1]
  %v442 = vperm.slane %v440, 0
  %v460 = vunpack.c.l.b16 %v423
  %v461 = vunpack.c.l.b16 %v424
  %v462 = vunpack.c.l.b16 %v425
  %v463 = vunpack.c.l.b16 %v426
  %v464 = vunpack.c.l.b16 %v427
  %v465 = vunpack.c.l.b16 %v428
  %v466 = vunpack.c.l.b16 %v429
  %v467 = vunpack.c.l.b16 %v430
  %v468 = vunpack.c.l.b16 %v431
  %v469 = vunpack.c.l.b16 %v432
  %v470 = vunpack.c.l.b16 %v433
  %v471 = vunpack.c.l.b16 %v434
  %v472 = vunpack.c.l.b16 %v435
  %v473 = vunpack.c.l.b16 %v436
  %v474 = vunpack.c.l.b16 %v437
  %v475 = vunpack.c.l.b16 %v438
  %v476 = vpack.c.b16 %v461, %v460
  %v477 = vpack.c.b16 %v463, %v462
  %v478 = vpack.c.b16 %v465, %v464
  %v479 = vpack.c.b16 %v467, %v466
  %v480 = vpack.c.b16 %v469, %v468
  %v481 = vpack.c.b16 %v471, %v470
  %v482 = vpack.c.b16 %v473, %v472
  %v483 = vpack.c.b16 %v475, %v474
  %492 = vmatpush.bf16.msra.mxu0 %v483
  %493 = vmatpush.bf16.msra.mxu0 %v482
  %494 = vmatpush.bf16.msra.mxu0 %v481
  %495 = vmatpush.bf16.msra.mxu0 %v480
  %496 = vmatpush.bf16.msra.mxu0 %v479
  %497 = vmatpush.bf16.msra.mxu0 %v478
  %498 = vmatpush.bf16.msra.mxu0 %v477
  %499 = vmatpush.bf16.msra.mxu0 %v476
  %500 = vmatmul.bf16.gmra.mxu0 %v421
  %v501 = vpop.f32.mrf.mxu0
  %v502 = vadd.f32 %v442, %v501
  %v503 = vpop.f32.mrf.mxu0
  %v504 = vadd.f32 %v442, %v503
  %505 = vdwg.mxu0
  %v506 = vmax.f32 %v502, 0.0
  %v507 = vmax.f32 %v504, 0.0
  %v508 = vpack.c.bf16 %v507, %v506
  %s509 = scalar_lea.vmem %s5, 128
  %v510 = vld [vmem:[%s509] sm:$0xf]
  %v511 = vld [vmem:[%s509 + $0x4] sm:$0xf]
  %v512 = vld [vmem:[%s509 + $0x8] sm:$0xf]
  %v513 = vld [vmem:[%s509 + $0xc] sm:$0xf]
  %v514 = vld [vmem:[%s509 + $0x10] sm:$0xf]
  %v515 = vld [vmem:[%s509 + $0x14] sm:$0xf]
  %v516 = vld [vmem:[%s509 + $0x18] sm:$0xf]
  %v517 = vld [vmem:[%s509 + $0x1c] sm:$0xf]
  %v518 = vld [vmem:[%s509 + $0x20] sm:$0xf]
  %v519 = vld [vmem:[%s509 + $0x24] sm:$0xf]
  %v520 = vld [vmem:[%s509 + $0x28] sm:$0xf]
  %v521 = vld [vmem:[%s509 + $0x2c] sm:$0xf]
  %v522 = vld [vmem:[%s509 + $0x30] sm:$0xf]
  %v523 = vld [vmem:[%s509 + $0x34] sm:$0xf]
  %v524 = vld [vmem:[%s509 + $0x38] sm:$0xf]
  %v525 = vld [vmem:[%s509 + $0x3c] sm:$0xf]
  %s526 = scalar_lea.vmem %s6, 2
  %v527 = vld [vmem:[%s526] sm:$0x1]
  %v529 = vperm.slane %v527, 0
  %v547 = vunpack.c.l.b16 %v510
  %v548 = vunpack.c.l.b16 %v511
  %v549 = vunpack.c.l.b16 %v512
  %v550 = vunpack.c.l.b16 %v513
  %v551 = vunpack.c.l.b16 %v514
  %v552 = vunpack.c.l.b16 %v515
  %v553 = vunpack.c.l.b16 %v516
  %v554 = vunpack.c.l.b16 %v517
  %v555 = vunpack.c.l.b16 %v518
  %v556 = vunpack.c.l.b16 %v519
  %v557 = vunpack.c.l.b16 %v520
  %v558 = vunpack.c.l.b16 %v521
  %v559 = vunpack.c.l.b16 %v522
  %v560 = vunpack.c.l.b16 %v523
  %v561 = vunpack.c.l.b16 %v524
  %v562 = vunpack.c.l.b16 %v525
  %v563 = vpack.c.b16 %v548, %v547
  %v564 = vpack.c.b16 %v550, %v549
  %v565 = vpack.c.b16 %v552, %v551
  %v566 = vpack.c.b16 %v554, %v553
  %v567 = vpack.c.b16 %v556, %v555
  %v568 = vpack.c.b16 %v558, %v557
  %v569 = vpack.c.b16 %v560, %v559
  %v570 = vpack.c.b16 %v562, %v561
  %579 = vmatpush.bf16.msra.mxu0 %v570
  %580 = vmatpush.bf16.msra.mxu0 %v569
  %581 = vmatpush.bf16.msra.mxu0 %v568
  %582 = vmatpush.bf16.msra.mxu0 %v567
  %583 = vmatpush.bf16.msra.mxu0 %v566
  %584 = vmatpush.bf16.msra.mxu0 %v565
  %585 = vmatpush.bf16.msra.mxu0 %v564
  %586 = vmatpush.bf16.msra.mxu0 %v563
  %587 = vmatmul.bf16.gmra.mxu0 %v508
  %v588 = vpop.f32.mrf.mxu0
  %v589 = vadd.f32 %v529, %v588
  %v590 = vpop.f32.mrf.mxu0
  %v591 = vadd.f32 %v529, %v590
  %592 = vdwg.mxu0
  %v593 = vadd.f32 %v419, %v589
  %v594 = vadd.f32 %v420, %v591
  %v595 = vpack.c.bf16 %v594, %v593
  %v596 = vld [vmem:[%s7] sm:$0xf]
  %v597 = vld [vmem:[%s7 + $0x4] sm:$0xf]
  %v598 = vld [vmem:[%s7 + $0x8] sm:$0xf]
  %v599 = vld [vmem:[%s7 + $0xc] sm:$0xf]
  %v600 = vld [vmem:[%s7 + $0x10] sm:$0xf]
  %v601 = vld [vmem:[%s7 + $0x14] sm:$0xf]
  %v602 = vld [vmem:[%s7 + $0x18] sm:$0xf]
  %v603 = vld [vmem:[%s7 + $0x1c] sm:$0xf]
  %v604 = vld [vmem:[%s7 + $0x20] sm:$0xf]
  %v605 = vld [vmem:[%s7 + $0x24] sm:$0xf]
  %v606 = vld [vmem:[%s7 + $0x28] sm:$0xf]
  %v607 = vld [vmem:[%s7 + $0x2c] sm:$0xf]
  %v608 = vld [vmem:[%s7 + $0x30] sm:$0xf]
  %v609 = vld [vmem:[%s7 + $0x34] sm:$0xf]
  %v610 = vld [vmem:[%s7 + $0x38] sm:$0xf]
  %v611 = vld [vmem:[%s7 + $0x3c] sm:$0xf]
  %v612 = vld [vmem:[%s8] sm:$0x1]
  %v614 = vperm.slane %v612, 0
  %v632 = vunpack.c.l.b16 %v596
  %v633 = vunpack.c.l.b16 %v597
  %v634 = vunpack.c.l.b16 %v598
  %v635 = vunpack.c.l.b16 %v599
  %v636 = vunpack.c.l.b16 %v600
  %v637 = vunpack.c.l.b16 %v601
  %v638 = vunpack.c.l.b16 %v602
  %v639 = vunpack.c.l.b16 %v603
  %v640 = vunpack.c.l.b16 %v604
  %v641 = vunpack.c.l.b16 %v605
  %v642 = vunpack.c.l.b16 %v606
  %v643 = vunpack.c.l.b16 %v607
  %v644 = vunpack.c.l.b16 %v608
  %v645 = vunpack.c.l.b16 %v609
  %v646 = vunpack.c.l.b16 %v610
  %v647 = vunpack.c.l.b16 %v611
  %v648 = vpack.c.b16 %v633, %v632
  %v649 = vpack.c.b16 %v635, %v634
  %v650 = vpack.c.b16 %v637, %v636
  %v651 = vpack.c.b16 %v639, %v638
  %v652 = vpack.c.b16 %v641, %v640
  %v653 = vpack.c.b16 %v643, %v642
  %v654 = vpack.c.b16 %v645, %v644
  %v655 = vpack.c.b16 %v647, %v646
  %664 = vmatpush.bf16.msra.mxu0 %v655
  %665 = vmatpush.bf16.msra.mxu0 %v654
  %666 = vmatpush.bf16.msra.mxu0 %v653
  %667 = vmatpush.bf16.msra.mxu0 %v652
  %668 = vmatpush.bf16.msra.mxu0 %v651
  %669 = vmatpush.bf16.msra.mxu0 %v650
  %670 = vmatpush.bf16.msra.mxu0 %v649
  %671 = vmatpush.bf16.msra.mxu0 %v648
  %672 = vmatmul.bf16.gmra.mxu0 %v595
  %v673 = vpop.f32.mrf.mxu0
  %v674 = vadd.f32 %v614, %v673
  %v675 = vpop.f32.mrf.mxu0
  %v676 = vadd.f32 %v614, %v675
  %677 = vdwg.mxu0
  %678 = vst [vmem:[%s9] sm:$0xff] %v674
  %679 = vst [vmem:[%s9 + $0x8] sm:$0xff] %v676
  // Predicated region
  $region38: #{forward.1} parent=0 // pred_check
    _
  $region39: #{forward.1} parent=0 // pred_check_branch
    %681 = sbr.rel (0) target = $region41
  $region40: #{forward.1} parent=0 // pred_region
    _
  $region41: #{forward.1} parent=0 // pred_fallthru
    _
  // Predicated region
  $region42: #{forward.1} parent=0 // pred_check
    _
  $region43: #{forward.1} parent=0 // pred_check_branch
    %683 = sbr.rel (0) target = $region45
  $region44: #{forward.1} parent=0 // pred_region
    _
  $region45: #{forward.1} parent=0 // pred_fallthru
    _

</llo_original>
